<compile_context>
chip_gen: v6e
topology: v6e:2x2x1
jax: 0.10.0
libtpu: 0.0.40
codegen_flags: <defaults>
</compile_context>

<pallas_src>
import functools

import jax
import jax.numpy as jnp
from jax.experimental import pallas as pl
from jax.experimental.pallas import tpu as pltpu


def _round_up(v, m):
    return (v + m - 1) // m * m


def _vmem_limit_bytes():
    """Generation-aware scoped-VMEM limit: <= 3/4 of physical, capped at 64 MiB."""
    cap = 128 * 1024 * 1024
    try:
        cap = int(getattr(pltpu.get_tpu_info(), "vmem_capacity_bytes", cap))
    except Exception:
        pass
    return int(min(64 * 1024 * 1024, (cap * 3) // 4))


# ---------------------------------------------------------------------------
# Stage 1: XW = x @ W   (bf16 operands, f32 accumulation, bf16/a_dtype output)
# ---------------------------------------------------------------------------
def _xw_kernel(x_ref, w_ref, o_ref):
    o_ref[...] = jnp.dot(
        x_ref[...], w_ref[...], preferred_element_type=jnp.float32
    ).astype(o_ref.dtype)


# ---------------------------------------------------------------------------
# Stage 2: out = dropout(relu(A_hat @ XW + b))
#   - accumulates directly into the f32 output block across the k axis
#   - bias / ReLU / dropout folded into the k==last epilogue
# ---------------------------------------------------------------------------
def _agg_kernel(*refs, tk, xw_resident, has_dropout):
    if has_dropout:
        a_ref, xw_ref, b_ref, drop_ref, o_ref = refs
    else:
        a_ref, xw_ref, b_ref, o_ref = refs

    k = pl.program_id(2)          # kept at top level (NOT inside pl.when)

    @pl.when(k == 0)
    def _init():
        o_ref[...] = jnp.zeros_like(o_ref)

    if xw_resident:
        # XW block is the full (padded) matrix, resident in VMEM; slice the
        # k-th row band (start is a multiple of tk by construction).
        xw_blk = xw_ref[pl.ds(k * tk, tk), :]
    else:
        xw_blk = xw_ref[...]

    o_ref[...] += jnp.dot(a_ref[...], xw_blk, preferred_element_type=jnp.float32)

    @pl.when(k == pl.num_programs(2) - 1)
    def _finalize():
        out = jnp.maximum(o_ref[...] + b_ref[...], 0.0)   # bias + ReLU
        if has_dropout:
            out = out * drop_ref[...]                      # precomputed keep-scale
        o_ref[...] = out


# ---------------------------------------------------------------------------
# Wrapper: pad to aligned shapes, run both Pallas stages, slice the result
# ---------------------------------------------------------------------------
def crd_forward(x, a_hat, weight, bias, *, p, training=False, seed=0,
                tm=512, tn=256, tk=1024, a_dtype=jnp.bfloat16):
    """Fused CRD forward: dropout(relu(A_hat @ (x @ W) + b)).

    x: [N, d_in] f32, a_hat: [N, N] dense normalized adjacency,
    weight: [d_in, d_out], bias: [d_out].
    a_dtype: dtype A_hat / XW travel in.  bf16 halves the HBM traffic of the
    N^2 operand at ~3-decimal-digit cost; pass jnp.float32 for full precision.
    """
    n, d_in = x.shape
    d_out = weight.shape[1]

    # ---- tile sizing (keep 128-lane / 8-sublane alignment) ------------------
    d_out_128 = _round_up(d_out, 128)
    if d_out_128 <= 512:
        tn = d_out_128               # single column block -> XW can stay resident
    else:
        tn = min(tn, d_out_128)
    tm = min(tm, _round_up(n, 128))
    tk = min(tk, _round_up(n, 128))
    # v7x has 2 TensorCores sharded over "parallel" grid axes: keep >= 2 row
    # blocks when the column grid has collapsed to a single block.
    if n > 128 and _round_up(n, tm) == tm and _round_up(d_out, tn) == tn:
        tm = max(128, _round_up((n + 1) // 2, 128))

    n_rows_p = _round_up(n, tm)      # A_hat rows / output rows (tiled by tm)
    n_red_p = _round_up(n, tk)       # reduction dim: A_hat cols / XW rows
    d_in_p = _round_up(d_in, 128)
    d_out_p = _round_up(d_out, tn)

    # ---- operand prep (cast before padding; bf16 operands, f32 accum) ------
    x_p = jnp.pad(x.astype(jnp.bfloat16), ((0, n_red_p - n), (0, d_in_p - d_in)))
    w_p = jnp.pad(weight.astype(jnp.bfloat16),
                  ((0, d_in_p - d_in), (0, d_out_p - d_out)))
    b_p = jnp.pad(bias.astype(jnp.float32),
                  (0, d_out_p - d_out)).reshape(1, d_out_p)
    a_p = jnp.pad(a_hat.astype(a_dtype), ((0, n_rows_p - n), (0, n_red_p - n)))

    vmem_limit = _vmem_limit_bytes()

    # ---- Stage 1: XW = x @ W (computed exactly once) ------------------------
    xw_cost = pl.CostEstimate(
        flops=2 * n_red_p * d_in_p * d_out_p, transcendentals=0,
        bytes_accessed=2 * (n_red_p * d_in_p + d_in_p * d_out_p
                            + n_red_p * d_out_p))
    xw = pl.pallas_call(
        _xw_kernel,
        out_shape=jax.ShapeDtypeStruct((n_red_p, d_out_p), a_dtype),
        grid=(n_red_p // tk, d_out_p // tn),
        in_specs=[
            pl.BlockSpec((tk, d_in_p), lambda i, j: (i, 0)),
            pl.BlockSpec((d_in_p, tn), lambda i, j: (0, j)),
        ],
        out_specs=pl.BlockSpec((tk, tn), lambda i, j: (i, j)),
        compiler_params=pltpu.CompilerParams(
            dimension_semantics=("parallel", "parallel"),
            vmem_limit_bytes=vmem_limit),
        cost_estimate=xw_cost,
    )(x_p, w_p)

    # ---- Dropout keep-scale (plain JAX; multiplied in the kernel epilogue) --
    has_dropout = bool(training) and float(p) > 0.0
    drop = None
    if has_dropout:
        if float(p) >= 1.0:
            drop = jnp.zeros((n_rows_p, d_out_p), jnp.float32)
        else:
            keep = jax.random.bernoulli(jax.random.PRNGKey(seed),
                                        1.0 - float(p), (n_rows_p, d_out_p))
            drop = keep.astype(jnp.float32) * (1.0 / (1.0 - float(p)))

    # ---- Stage 2: tiled A_hat @ XW + bias + ReLU (+ dropout) ----------------
    itemsize = jnp.dtype(a_dtype).itemsize
    xw_bytes = n_red_p * d_out_p * itemsize
    # Keep XW fully VMEM-resident (fetched once) when it fits comfortably and
    # there is a single column block; otherwise stream k-tiles.
    xw_resident = (d_out_p == tn) and (2 * xw_bytes <= 16 * 1024 * 1024)

    if xw_resident:
        xw_spec = pl.BlockSpec((n_red_p, d_out_p), lambda i, j, k: (0, 0))
        xw_read_bytes = xw_bytes
    else:
        xw_spec = pl.BlockSpec((tk, tn), lambda i, j, k: (k, j))
        xw_read_bytes = (n_rows_p // tm) * xw_bytes

    in_specs = [
        pl.BlockSpec((tm, tk), lambda i, j, k: (i, k)),    # A_hat tile
        xw_spec,                                           # XW (resident or tile)
        pl.BlockSpec((1, tn), lambda i, j, k: (0, j)),     # bias
    ]
    inputs = [a_p, xw, b_p]
    if has_dropout:
        in_specs.append(pl.BlockSpec((tm, tn), lambda i, j, k: (i, j)))
        inputs.append(drop)

    agg_cost = pl.CostEstimate(
        flops=2 * n_rows_p * n_red_p * d_out_p, transcendentals=0,
        bytes_accessed=(n_rows_p * n_red_p * itemsize + xw_read_bytes
                        + n_rows_p * d_out_p * 4
                        + (n_rows_p * d_out_p * 4 if has_dropout else 0)))

    kernel = functools.partial(_agg_kernel, tk=tk,
                               xw_resident=xw_resident, has_dropout=has_dropout)
    out = pl.pallas_call(
        kernel,
        out_shape=jax.ShapeDtypeStruct((n_rows_p, d_out_p), jnp.float32),
        grid=(n_rows_p // tm, d_out_p // tn, n_red_p // tk),  # reduction last
        in_specs=in_specs,
        out_specs=pl.BlockSpec((tm, tn), lambda i, j, k: (i, j)),
        compiler_params=pltpu.CompilerParams(
            dimension_semantics=("parallel", "parallel", "arbitrary"),
            vmem_limit_bytes=vmem_limit),
        cost_estimate=agg_cost,
    )(*inputs)

    return out[:n, :d_out]


# ---------------------------------------------------------------------------
# Plain-JAX glue: dense symmetric-normalized adjacency (GCNConv gcn_norm)
# ---------------------------------------------------------------------------
def build_normalized_adjacency(edge_index, num_nodes):
    # NOTE: assumes edge_index has no pre-existing self-loops (added here);
    # duplicate edges accumulate as weights > 1 (differs from PyG de-dup).
    src = edge_index[0]
    dst = edge_index[1]
    a = jnp.zeros((num_nodes, num_nodes), jnp.float32)
    a = a.at[dst, src].add(1.0)                      # messages src -> dst
    a = a + jnp.eye(num_nodes, dtype=jnp.float32)    # self loops
    deg = a.sum(axis=1)
    dinv = jnp.where(deg > 0, 1.0 / jnp.sqrt(deg), 0.0)
    return dinv[:, None] * a * dinv[None, :]

# TODO(synk): for large sparse graphs, replace the dense A_hat matmul with a
# block-sparse path (neighbor-block indices via scalar prefetch) that skips
# all-zero A_hat tiles.


# ---------------------------------------------------------------------------
# Deterministic parameter init (GCNConv: glorot weight, zero bias)
# ---------------------------------------------------------------------------
def init_params(key, d_in, d_out):
    bound = (6.0 / (d_in + d_out)) ** 0.5
    w = jax.random.uniform(key, (d_in, d_out), jnp.float32, -bound, bound)
    b = jnp.zeros((d_out,), jnp.float32)
    return w, b


if __name__ == "__main__":
    # ---------------- small test: ring graph -------------------------------
    N, D_IN, D_OUT, P = 8, 16, 32, 0.5

    key = jax.random.PRNGKey(0)
    kx, kw, ke = jax.random.split(key, 3)

    x = jax.random.normal(kx, (N, D_IN), jnp.float32)
    src = jnp.arange(N, dtype=jnp.int32)
    dst = (src + 1) % N
    edge_index = jnp.stack(
        [jnp.concatenate([src, dst]), jnp.concatenate([dst, src])], axis=0)

    weight, bias = init_params(kw, D_IN, D_OUT)
    a_hat = build_normalized_adjacency(edge_index, N)

    # eval-mode forward (dropout is identity, matching training=False)
    out = crd_forward(x, a_hat, weight, bias, p=P, training=False)
    out = jax.block_until_ready(out)

    ref = jnp.maximum(a_hat @ (x @ weight) + bias[None, :], 0.0)
    assert out.shape == (N, D_OUT)
    assert bool(jnp.all(jnp.isfinite(out)))
    assert bool(jnp.all(out >= 0.0))
    assert bool(jnp.allclose(out, ref, rtol=5e-2, atol=5e-2))   # bf16 tol

    # training-mode forward (exercises the in-kernel dropout epilogue)
    out_tr = crd_forward(x, a_hat, weight, bias, p=P, training=True, seed=123)
    out_tr = jax.block_until_ready(out_tr)
    assert out_tr.shape == (N, D_OUT)
    assert bool(jnp.all(jnp.isfinite(out_tr)))
    assert bool(jnp.all(out_tr >= 0.0))
    # each element is either dropped (0) or scaled by exactly 1/(1-p) = 2
    assert bool(jnp.all((out_tr == 0.0) | (jnp.abs(out_tr - 2.0 * out) < 1e-3)))

    # ---------------- medium test: random graph, multi-block grid ----------
    N2, D_IN2, D_OUT2 = 300, 48, 96
    kx2, kw2, ks, kd = jax.random.split(ke, 4)
    x2 = jax.random.normal(kx2, (N2, D_IN2), jnp.float32)
    src2 = jax.random.randint(ks, (600,), 0, N2, jnp.int32)
    dst2 = jax.random.randint(kd, (600,), 0, N2, jnp.int32)
    edge_index2 = jnp.stack([src2, dst2], axis=0)
    weight2, bias2 = init_params(kw2, D_IN2, D_OUT2)
    a_hat2 = build_normalized_adjacency(edge_index2, N2)

    # force small tiles so the k-accumulation loop and row/col grids have >1 step
    out2 = crd_forward(x2, a_hat2, weight2, bias2, p=P, training=False,
                       tm=128, tn=128, tk=128)
    out2 = jax.block_until_ready(out2)
    ref2 = jnp.maximum(a_hat2 @ (x2 @ weight2) + bias2[None, :], 0.0)
    assert out2.shape == (N2, D_OUT2)
    assert bool(jnp.all(jnp.isfinite(out2)))
    assert bool(jnp.allclose(out2, ref2, rtol=5e-2, atol=5e-2))

    print("KERNEL_OK")
</pallas_src>

<mosaic_0001>
module attributes {stable_mosaic.version = 11 : i64} {
  func.func @_xw_kernel(%arg0: i32, %arg1: i32, %arg2: memref<128x128xbf16, #tpu.memory_space<vmem>>, %arg3: memref<128x128xbf16, #tpu.memory_space<vmem>>, %arg4: memref<128x128xbf16, #tpu.memory_space<vmem>>) attributes {dimension_semantics = [#tpu.dimension_semantics<parallel>, #tpu.dimension_semantics<parallel>], iteration_bounds = array<i64: 1, 1>, scalar_prefetch = 0 : i64, scratch_operands = 0 : i64, tpu.core_type = #tpu.core_type<tc>, window_params = [{transform_indices = @transform_0, window_bounds = array<i64: 128, 128>}, {transform_indices = @transform_1, window_bounds = array<i64: 128, 128>}, {transform_indices = @transform_2, window_bounds = array<i64: 128, 128>}]} {
    %c0 = arith.constant 0 : index
    %c0_0 = arith.constant 0 : index
    %0 = vector.load %arg2[%c0, %c0_0] : memref<128x128xbf16, #tpu.memory_space<vmem>>, vector<128x128xbf16>
    %c0_1 = arith.constant 0 : index
    %c0_2 = arith.constant 0 : index
    %1 = vector.load %arg3[%c0_1, %c0_2] : memref<128x128xbf16, #tpu.memory_space<vmem>>, vector<128x128xbf16>
    %cst = arith.constant dense<0.000000e+00> : vector<128x128xf32>
    %2 = tpu.matmul %0, %1, %cst {dimension_numbers = #tpu.dot_dimension_numbers<[1], [0], [0], [1], [0, 0, 1, 1], [], []>} : vector<128x128xbf16>, vector<128x128xbf16>, vector<128x128xf32> -> vector<128x128xf32>
    %3 = arith.truncf %2 : vector<128x128xf32> to vector<128x128xbf16>
    %c0_3 = arith.constant 0 : index
    %c0_4 = arith.constant 0 : index
    %4 = vector.load %arg4[%c0_3, %c0_4] : memref<128x128xbf16, #tpu.memory_space<vmem>>, vector<128x128xbf16>
    tpu.vector_store %arg4[%c0_3, %c0_4], %3 {strides = array<i32>} : memref<128x128xbf16, #tpu.memory_space<vmem>>, vector<128x128xbf16>,
    return
  }
  func.func @transform_0(%arg0: i32, %arg1: i32) -> (i32, i32) {
    %c0_i32 = arith.constant 0 : i32
    %c0_i32_0 = arith.constant 0 : i32
    return %arg0, %c0_i32 : i32, i32
  }
  func.func @transform_1(%arg0: i32, %arg1: i32) -> (i32, i32) {
    %c0_i32 = arith.constant 0 : i32
    %c0_i32_0 = arith.constant 0 : i32
    return %c0_i32, %arg1 : i32, i32
  }
  func.func @transform_2(%arg0: i32, %arg1: i32) -> (i32, i32) {
    %c0_i32 = arith.constant 0 : i32
    return %arg0, %arg1 : i32, i32
  }
}

</mosaic_0001>

<llo_original>
// kernel: tpu_custom_call.1
$region0: #{tpu_custom_call.1}
  #allocation0 [shape = 'u32[]', space=smem, size = 0x4, offset = 0x4, fixed_abs, tag = 'smem constant byte address 0x4 - core index']
  #allocation1 [shape = 'u32[144,128]{1,0:T(1,128)}', space=vmem, size = 0x12000, scoped, tag = 'internal scratch']
  %s0 = inlined_call_operand.hbm [shape: bf16[128,128], index: 0, kind: input, shape index: {}]
  %s1 = inlined_call_operand.hbm [shape: bf16[128,128], index: 1, kind: input, shape index: {}]
  %s2 = inlined_call_operand.hbm [shape: bf16[128,128], index: 2, kind: output, shape index: {}]
  %s3 = sld [smem:[#allocation0]]
  $region26: #{tpu_custom_call.1} parent=0
    _
  %s5 = ssub.s32 1, %s3
  %s6 = scalar_select 0, %s5, %s3
  $region1: #{tpu_custom_call.1} parent=0
    #allocation2 [shape = 'u8[32768]{0}', space=vmem, size = 0x8000, scoped, tag = 'input window, operand 0, single buffered']
    #allocation3 [shape = 's32[1]{0}', space=sflag, size = 0x4, scoped, tag = 'scoped memory for tpu_custom_call.1']
    #allocation4 [shape = 's32[1]{0}', space=sflag, size = 0x4, scoped, tag = 'scoped memory for tpu_custom_call.1']
    #allocation5 [shape = 'u8[32768]{0}', space=vmem, size = 0x8000, scoped, tag = 'input window, operand 1, single buffered']
    #allocation6 [shape = 's32[1]{0}', space=sflag, size = 0x4, scoped, tag = 'scoped memory for tpu_custom_call.1']
    #allocation7 [shape = 'u8[32768]{0}', space=vmem, size = 0x8000, scoped, tag = 'output window, operand 0, single buffered']
    %7 = vsyncpa [#allocation3], 0
    %8 = vsyncpa [#allocation6], 0
    %9 = vsyncpa [#allocation4], 0
    // Predicated region
    $region2: #{tpu_custom_call.1} parent=1 // pred_check
      _
    $region3: #{tpu_custom_call.1} parent=1 // pred_check_branch
      %11 = sbr.rel (0) target = $region5
    $region4: #{tpu_custom_call.1} parent=1 // pred_region
      %s13 = ssub.s32 1024, 1024
      %14 = vsyncadd [#allocation3], %s13
      %s15 = sshll.u32 [#allocation2], 4
      %s16 = int_to_ptr.vmem [resolvable:$true] %s15
      %21 = dma.hbm_to_vmem [thread:$0]  %s0, 1024, %s16, [#allocation3], 64, 64, 4
    $region5: #{tpu_custom_call.1} parent=1 // pred_fallthru
      _
    // Predicated region
    $region6: #{tpu_custom_call.1} parent=1 // pred_check
      _
    $region7: #{tpu_custom_call.1} parent=1 // pred_check_branch
      %23 = sbr.rel (0) target = $region9
    $region8: #{tpu_custom_call.1} parent=1 // pred_region
      %s25 = ssub.s32 1024, 1024
      %26 = vsyncadd [#allocation6], %s25
      %s27 = sshll.u32 [#allocation5], 4
      %s28 = int_to_ptr.vmem [resolvable:$true] %s27
      %33 = dma.hbm_to_vmem [thread:$0]  %s1, 1024, %s28, [#allocation6], 64, 64, 4
    $region9: #{tpu_custom_call.1} parent=1 // pred_fallthru
      _
    // Predicated region
    $region10: #{tpu_custom_call.1} parent=1 // pred_check
      _
    $region11: #{tpu_custom_call.1} parent=1 // pred_check_branch
      %35 = sbr.rel (0) target = $region13
    $region12: #{tpu_custom_call.1} parent=1 // pred_region
      %36 = dma.done [#allocation3], 1024
    $region13: #{tpu_custom_call.1} parent=1 // pred_fallthru
      _
    // Predicated region
    $region14: #{tpu_custom_call.1} parent=1 // pred_check
      _
    $region15: #{tpu_custom_call.1} parent=1 // pred_check_branch
      %38 = sbr.rel (0) target = $region17
    $region16: #{tpu_custom_call.1} parent=1 // pred_region
      %39 = dma.done [#allocation6], 1024
    $region17: #{tpu_custom_call.1} parent=1 // pred_fallthru
      _
    %v41 = vld [vmem:[#allocation2] sm:$0xf]
    %v42 = vld [vmem:[#allocation2 + $0x4] sm:$0xf]
    %v43 = vld [vmem:[#allocation2 + $0x8] sm:$0xf]
    %v44 = vld [vmem:[#allocation2 + $0xc] sm:$0xf]
    %v45 = vld [vmem:[#allocation2 + $0x10] sm:$0xf]
    %v46 = vld [vmem:[#allocation2 + $0x14] sm:$0xf]
    %v47 = vld [vmem:[#allocation2 + $0x18] sm:$0xf]
    %v48 = vld [vmem:[#allocation2 + $0x1c] sm:$0xf]
    %v49 = vld [vmem:[#allocation2 + $0x20] sm:$0xf]
    %v50 = vld [vmem:[#allocation2 + $0x24] sm:$0xf]
    %v51 = vld [vmem:[#allocation2 + $0x28] sm:$0xf]
    %v52 = vld [vmem:[#allocation2 + $0x2c] sm:$0xf]
    %v53 = vld [vmem:[#allocation2 + $0x30] sm:$0xf]
    %v54 = vld [vmem:[#allocation2 + $0x34] sm:$0xf]
    %v55 = vld [vmem:[#allocation2 + $0x38] sm:$0xf]
    %v56 = vld [vmem:[#allocation2 + $0x3c] sm:$0xf]
    %v57 = vld [vmem:[#allocation5] sm:$0xf]
    %v58 = vld [vmem:[#allocation5 + $0x4] sm:$0xf]
    %v59 = vld [vmem:[#allocation5 + $0x8] sm:$0xf]
    %v60 = vld [vmem:[#allocation5 + $0xc] sm:$0xf]
    %v61 = vld [vmem:[#allocation5 + $0x10] sm:$0xf]
    %v62 = vld [vmem:[#allocation5 + $0x14] sm:$0xf]
    %v63 = vld [vmem:[#allocation5 + $0x18] sm:$0xf]
    %v64 = vld [vmem:[#allocation5 + $0x1c] sm:$0xf]
    %v65 = vld [vmem:[#allocation5 + $0x20] sm:$0xf]
    %v66 = vld [vmem:[#allocation5 + $0x24] sm:$0xf]
    %v67 = vld [vmem:[#allocation5 + $0x28] sm:$0xf]
    %v68 = vld [vmem:[#allocation5 + $0x2c] sm:$0xf]
    %v69 = vld [vmem:[#allocation5 + $0x30] sm:$0xf]
    %v70 = vld [vmem:[#allocation5 + $0x34] sm:$0xf]
    %v71 = vld [vmem:[#allocation5 + $0x38] sm:$0xf]
    %v72 = vld [vmem:[#allocation5 + $0x3c] sm:$0xf]
    %v89 = vunpack.c.l.b16 %v41
    %v90 = vunpack.c.l.b16 %v42
    %v91 = vunpack.c.l.b16 %v43
    %v92 = vunpack.c.l.b16 %v44
    %v93 = vunpack.c.l.b16 %v45
    %v94 = vunpack.c.l.b16 %v46
    %v95 = vunpack.c.l.b16 %v47
    %v96 = vunpack.c.l.b16 %v48
    %v97 = vunpack.c.l.b16 %v49
    %v98 = vunpack.c.l.b16 %v50
    %v99 = vunpack.c.l.b16 %v51
    %v100 = vunpack.c.l.b16 %v52
    %v101 = vunpack.c.l.b16 %v53
    %v102 = vunpack.c.l.b16 %v54
    %v103 = vunpack.c.l.b16 %v55
    %v104 = vunpack.c.l.b16 %v56
    %v105 = vpack.c.b16 %v90, %v89
    %v106 = vpack.c.b16 %v92, %v91
    %v107 = vpack.c.b16 %v94, %v93
    %v108 = vpack.c.b16 %v96, %v95
    %v109 = vpack.c.b16 %v98, %v97
    %v110 = vpack.c.b16 %v100, %v99
    %v111 = vpack.c.b16 %v102, %v101
    %v112 = vpack.c.b16 %v104, %v103
    %v137 = vunpack.c.l.b16 %v57
    %v138 = vunpack.c.l.b16 %v58
    %v139 = vunpack.c.l.b16 %v59
    %v140 = vunpack.c.l.b16 %v60
    %v141 = vunpack.c.l.b16 %v61
    %v142 = vunpack.c.l.b16 %v62
    %v143 = vunpack.c.l.b16 %v63
    %v144 = vunpack.c.l.b16 %v64
    %v145 = vunpack.c.l.b16 %v65
    %v146 = vunpack.c.l.b16 %v66
    %v147 = vunpack.c.l.b16 %v67
    %v148 = vunpack.c.l.b16 %v68
    %v149 = vunpack.c.l.b16 %v69
    %v150 = vunpack.c.l.b16 %v70
    %v151 = vunpack.c.l.b16 %v71
    %v152 = vunpack.c.l.b16 %v72
    %v153 = vpack.c.b16 %v138, %v137
    %v154 = vpack.c.b16 %v140, %v139
    %v155 = vpack.c.b16 %v142, %v141
    %v156 = vpack.c.b16 %v144, %v143
    %v157 = vpack.c.b16 %v146, %v145
    %v158 = vpack.c.b16 %v148, %v147
    %v159 = vpack.c.b16 %v150, %v149
    %v160 = vpack.c.b16 %v152, %v151
    %169 = vmatprep.subr.bf16.mxu0 0
    %170 = vmatpush1.bf16.msra.mxu0 %v160
    %171 = vmatprep.subr.bf16.mxu0 0
    %172 = vmatpush1.bf16.msra.mxu0 %v159
    %173 = vmatprep.subr.bf16.mxu0 0
    %174 = vmatpush1.bf16.msra.mxu0 %v158
    %175 = vmatprep.subr.bf16.mxu0 0
    %176 = vmatpush1.bf16.msra.mxu0 %v157
    %177 = vmatprep.subr.bf16.mxu0 0
    %178 = vmatpush1.bf16.msra.mxu0 %v156
    %179 = vmatprep.subr.bf16.mxu0 0
    %180 = vmatpush1.bf16.msra.mxu0 %v155
    %181 = vmatprep.subr.bf16.mxu0 0
    %182 = vmatpush1.bf16.msra.mxu0 %v154
    %183 = vmatprep.subr.bf16.mxu0 0
    %184 = vmatpush1.bf16.msra.mxu0 %v153
    %185 = vmatprep.subr.bf16.mxu0 0
    %186 = vmatpush2.bf16.msra.mxu0 0
    %187 = vmatprep.subr.bf16.mxu0 0
    %188 = vmatpush2.bf16.msra.mxu0 0
    %189 = vmatprep.subr.bf16.mxu0 0
    %190 = vmatpush2.bf16.msra.mxu0 0
    %191 = vmatprep.subr.bf16.mxu0 0
    %192 = vmatpush2.bf16.msra.mxu0 0
    %193 = vmatprep.subr.bf16.mxu0 0
    %194 = vmatpush2.bf16.msra.mxu0 0
    %195 = vmatprep.subr.bf16.mxu0 0
    %196 = vmatpush2.bf16.msra.mxu0 0
    %197 = vmatprep.subr.bf16.mxu0 0
    %198 = vmatpush2.bf16.msra.mxu0 0
    %199 = vmatprep.subr.bf16.mxu0 0
    %200 = vmatpush2.bf16.msra.mxu0 0
    %201 = vmatprep.mubr.bf16.mxu0 0
    %202 = vmatmul.mubr.bf16.gmra.mxu0 %v105
    %v203 = vpop.f32.mrf.mxu0
    %v204 = vadd.f32 0.0, %v203
    %v205 = vpop.f32.mrf.mxu0
    %v206 = vpop.f32.mrf.mxu0
    %v207 = vadd.f32 0.0, %v206
    %v208 = vpop.f32.mrf.mxu0
    %209 = vmatprep.mubr.bf16.mxu0 0
    %210 = vmatmul.mubr.bf16.gmra.mxu0 %v106
    %v211 = vpop.f32.mrf.mxu0
    %v212 = vadd.f32 0.0, %v211
    %v213 = vpop.f32.mrf.mxu0
    %v214 = vpop.f32.mrf.mxu0
    %v215 = vadd.f32 0.0, %v214
    %v216 = vpop.f32.mrf.mxu0
    %217 = vmatprep.mubr.bf16.mxu0 0
    %218 = vmatmul.mubr.bf16.gmra.mxu0 %v107
    %v219 = vpop.f32.mrf.mxu0
    %v220 = vadd.f32 0.0, %v219
    %v221 = vpop.f32.mrf.mxu0
    %v222 = vpop.f32.mrf.mxu0
    %v223 = vadd.f32 0.0, %v222
    %v224 = vpop.f32.mrf.mxu0
    %225 = vmatprep.mubr.bf16.mxu0 0
    %226 = vmatmul.mubr.bf16.gmra.mxu0 %v108
    %v227 = vpop.f32.mrf.mxu0
    %v228 = vadd.f32 0.0, %v227
    %v229 = vpop.f32.mrf.mxu0
    %v230 = vpop.f32.mrf.mxu0
    %v231 = vadd.f32 0.0, %v230
    %v232 = vpop.f32.mrf.mxu0
    %233 = vmatprep.mubr.bf16.mxu0 0
    %234 = vmatmul.mubr.bf16.gmra.mxu0 %v109
    %v235 = vpop.f32.mrf.mxu0
    %v236 = vadd.f32 0.0, %v235
    %v237 = vpop.f32.mrf.mxu0
    %v238 = vpop.f32.mrf.mxu0
    %v239 = vadd.f32 0.0, %v238
    %v240 = vpop.f32.mrf.mxu0
    %241 = vmatprep.mubr.bf16.mxu0 0
    %242 = vmatmul.mubr.bf16.gmra.mxu0 %v110
    %v243 = vpop.f32.mrf.mxu0
    %v244 = vadd.f32 0.0, %v243
    %v245 = vpop.f32.mrf.mxu0
    %v246 = vpop.f32.mrf.mxu0
    %v247 = vadd.f32 0.0, %v246
    %v248 = vpop.f32.mrf.mxu0
    %249 = vmatprep.mubr.bf16.mxu0 0
    %250 = vmatmul.mubr.bf16.gmra.mxu0 %v111
    %v251 = vpop.f32.mrf.mxu0
    %v252 = vadd.f32 0.0, %v251
    %v253 = vpop.f32.mrf.mxu0
    %v254 = vpop.f32.mrf.mxu0
    %v255 = vadd.f32 0.0, %v254
    %v256 = vpop.f32.mrf.mxu0
    %257 = vmatprep.mubr.bf16.mxu0 0
    %258 = vmatmul.mubr.bf16.gmra.mxu0 %v112
    %v259 = vpop.f32.mrf.mxu0
    %v260 = vadd.f32 0.0, %v259
    %v261 = vpop.f32.mrf.mxu0
    %v262 = vpop.f32.mrf.mxu0
    %v263 = vadd.f32 0.0, %v262
    %v264 = vpop.f32.mrf.mxu0
    %265 = vdwg.mxu0
    %v266 = vpack.c.bf16 %v207, %v204
    %v267 = vpack.c.bf16 %v215, %v212
    %v268 = vpack.c.bf16 %v223, %v220
    %v269 = vpack.c.bf16 %v231, %v228
    %v270 = vpack.c.bf16 %v239, %v236
    %v271 = vpack.c.bf16 %v247, %v244
    %v272 = vpack.c.bf16 %v255, %v252
    %v273 = vpack.c.bf16 %v263, %v260
    %v282 = vunpack.c.l.b16 %v266
    %v283 = vunpack.c.h.b16 %v266
    %v284 = vunpack.c.l.b16 %v267
    %v285 = vunpack.c.h.b16 %v267
    %v286 = vunpack.c.l.b16 %v268
    %v287 = vunpack.c.h.b16 %v268
    %v288 = vunpack.c.l.b16 %v269
    %v289 = vunpack.c.h.b16 %v269
    %v290 = vunpack.c.l.b16 %v270
    %v291 = vunpack.c.h.b16 %v270
    %v292 = vunpack.c.l.b16 %v271
    %v293 = vunpack.c.h.b16 %v271
    %v294 = vunpack.c.l.b16 %v272
    %v295 = vunpack.c.h.b16 %v272
    %v296 = vunpack.c.l.b16 %v273
    %v297 = vunpack.c.h.b16 %v273
    %v298 = vpack.c.b16 %v282, %v282
    %v299 = vpack.c.b16 %v283, %v283
    %v300 = vpack.c.b16 %v284, %v284
    %v301 = vpack.c.b16 %v285, %v285
    %v302 = vpack.c.b16 %v286, %v286
    %v303 = vpack.c.b16 %v287, %v287
    %v304 = vpack.c.b16 %v288, %v288
    %v305 = vpack.c.b16 %v289, %v289
    %v306 = vpack.c.b16 %v290, %v290
    %v307 = vpack.c.b16 %v291, %v291
    %v308 = vpack.c.b16 %v292, %v292
    %v309 = vpack.c.b16 %v293, %v293
    %v310 = vpack.c.b16 %v294, %v294
    %v311 = vpack.c.b16 %v295, %v295
    %v312 = vpack.c.b16 %v296, %v296
    %v313 = vpack.c.b16 %v297, %v297
    %330 = vst [vmem:[#allocation7] sm:$0xf] %v298
    %331 = vst [vmem:[#allocation7 + $0x4] sm:$0xf] %v299
    %332 = vst [vmem:[#allocation7 + $0x8] sm:$0xf] %v300
    %333 = vst [vmem:[#allocation7 + $0xc] sm:$0xf] %v301
    %334 = vst [vmem:[#allocation7 + $0x10] sm:$0xf] %v302
    %335 = vst [vmem:[#allocation7 + $0x14] sm:$0xf] %v303
    %336 = vst [vmem:[#allocation7 + $0x18] sm:$0xf] %v304
    %337 = vst [vmem:[#allocation7 + $0x1c] sm:$0xf] %v305
    %338 = vst [vmem:[#allocation7 + $0x20] sm:$0xf] %v306
    %339 = vst [vmem:[#allocation7 + $0x24] sm:$0xf] %v307
    %340 = vst [vmem:[#allocation7 + $0x28] sm:$0xf] %v308
    %341 = vst [vmem:[#allocation7 + $0x2c] sm:$0xf] %v309
    %342 = vst [vmem:[#allocation7 + $0x30] sm:$0xf] %v310
    %343 = vst [vmem:[#allocation7 + $0x34] sm:$0xf] %v311
    %344 = vst [vmem:[#allocation7 + $0x38] sm:$0xf] %v312
    %345 = vst [vmem:[#allocation7 + $0x3c] sm:$0xf] %v313
    // Predicated region
    $region18: #{tpu_custom_call.1} parent=1 // pred_check
      _
    $region19: #{tpu_custom_call.1} parent=1 // pred_check_branch
      %347 = sbr.rel (0) target = $region21
    $region20: #{tpu_custom_call.1} parent=1 // pred_region
      %s349 = ssub.s32 1024, 1024
      %350 = vsyncadd [#allocation4], %s349
      %s351 = sshll.u32 [#allocation7], 4
      %s352 = int_to_ptr.vmem [resolvable:$true] %s351
      %357 = dma.vmem_to_hbm [thread:$0]  %s352, 1024, %s2, [#allocation4], 64, 64, 4
    $region21: #{tpu_custom_call.1} parent=1 // pred_fallthru
      _
    // Predicated region
    $region22: #{tpu_custom_call.1} parent=1 // pred_check
      _
    $region23: #{tpu_custom_call.1} parent=1 // pred_check_branch
      %359 = sbr.rel (0) target = $region25
    $region24: #{tpu_custom_call.1} parent=1 // pred_region
      %360 = dma.done [#allocation4], 1024
    $region25: #{tpu_custom_call.1} parent=1 // pred_fallthru
      _
    %361 = vsyncpa [#allocation3], 1
    %362 = vsyncpa [#allocation6], 1
    %363 = vsyncpa [#allocation4], 1

</llo_original>
